<compile_context>
chip_gen: v7x
topology: tpu7x:2x2x1
jax: 0.10.0
libtpu: 0.0.40
codegen_flags: <defaults>
</compile_context>

<pallas_src>
import functools

import jax
import jax.numpy as jnp
from jax.experimental import pallas as pl
from jax.experimental.pallas import tpu as pltpu


def _round_up(v, m):
    return ((v + m - 1) // m) * m


def _cdiv(a, b):
    return (a + b - 1) // b


def _budgets():
    """Generation-aware VMEM budgets (bytes)."""
    try:
        cap = pltpu.get_tpu_info().vmem_capacity_bytes
    except Exception:
        cap = 64 * 1024 * 1024  # assume the smallest (v7x-like) VMEM
    if cap <= 96 * 1024 * 1024:
        # v7x: 64 MiB VMEM per TensorCore -> conservative slabs.
        return dict(vmem_limit=48 << 20, w_budget=12 << 20,
                    x_budget=8 << 20, tm_cap=512)
    # v5e / v6e: 128 MiB VMEM -> bigger slabs convert weight-stream-bound
    # shapes into MXU-bound ones.
    return dict(vmem_limit=96 << 20, w_budget=28 << 20,
                x_budget=24 << 20, tm_cap=1024)


# ----------------------------------------------------------------------------
# Kernels
# ----------------------------------------------------------------------------
def _fullk_kernel(alpha_ref, x_ref, w_ref, b_ref, o_ref, *, tile_n, multi_n):
    # alpha_ref: (1,)      f32 scalar in SMEM
    # x_ref:     (TM, Dp)  input tile, full contraction dim, input dtype
    # w_ref:     (Dp, TN)  pre-transposed weight slab (matmul dtype)
    # b_ref:     (1, TN)   f32 bias slab
    x = x_ref[...]
    h = jnp.dot(x.astype(w_ref.dtype), w_ref[...],
                preferred_element_type=jnp.float32)            # MXU, f32 acc
    h = jnp.maximum(h + b_ref[...].astype(jnp.float32), 0.0)   # bias + ReLU
    if multi_n:
        # Residual comes from the already-resident x tile (no second HBM read
        # of x); the start is 128-lane aligned so the view is tile-dense.
        j = pl.program_id(1)
        res = x_ref[:, pl.ds(pl.multiple_of(j * tile_n, 128), tile_n)]
    else:
        res = x
    o_ref[...] = (res.astype(jnp.float32) + alpha_ref[0] * h).astype(o_ref.dtype)


def _ksplit_kernel(alpha_ref, xmm_ref, xres_ref, w_ref, b_ref, o_ref, acc_ref):
    # Grid: (i over M tiles, j over N tiles, k over K tiles) -- k innermost.
    # xmm_ref:  (TM, TK) matmul operand (matmul dtype)
    # xres_ref: (TM, TN) residual slab (input dtype), resident across k
    # w_ref:    (TK, TN) weight block; acc_ref: (TM, TN) f32 accumulator
    k = pl.program_id(2)

    @pl.when(k == 0)
    def _():
        acc_ref[...] = jnp.zeros_like(acc_ref)

    acc_ref[...] += jnp.dot(xmm_ref[...], w_ref[...],
                            preferred_element_type=jnp.float32)

    @pl.when(k == pl.num_programs(2) - 1)
    def _():
        h = jnp.maximum(acc_ref[...] + b_ref[...].astype(jnp.float32), 0.0)
        o_ref[...] = (xres_ref[...].astype(jnp.float32)
                      + alpha_ref[0] * h).astype(o_ref.dtype)


# ----------------------------------------------------------------------------
# Wrapper
# ----------------------------------------------------------------------------
def rezero_linear(x, w, b, resweight, *, tile_m=None, tile_n=None, tile_k=None,
                  matmul_dtype=jnp.bfloat16, force_pallas=False):
    """x: (..., D), w: (D_out, D_in) PyTorch layout, b: (D_out,), resweight scalar.
    Requires D_in == D_out (residual add, as in the PyTorch module)."""
    orig_shape = x.shape
    D_in = orig_shape[-1]
    D_out, D_in_w = w.shape
    assert D_in_w == D_in
    assert D_in == D_out, "residual add requires inputs == outputs"

    x2 = x.reshape(-1, D_in)
    M = x2.shape[0]

    # Tiny layers: padding D up to 128 lanes would inflate HBM traffic 4x+ for a
    # layer that is per-step-overhead dominated -> let XLA's fused path take it.
    if D_in <= 64 and not force_pallas:
        rw = jnp.asarray(resweight, jnp.float32)
        h = jnp.maximum(jnp.dot(x2, w.T) + b, 0.0)
        return (x2 + (rw * h).astype(x2.dtype)).reshape(orig_shape)

    budg = _budgets()
    xbytes = x2.dtype.itemsize
    mmbytes = jnp.dtype(matmul_dtype).itemsize
    min_bytes = min(xbytes, mmbytes)
    row_align = 8 if min_bytes >= 4 else (16 if min_bytes == 2 else 32)

    Dp = _round_up(D_in, 128)  # lane-dense tiles / unmasked stores

    # Layout plumbing done once, outside the kernel.
    alpha = jnp.asarray(resweight, jnp.float32).reshape(1,)
    wt = jnp.pad(w.T.astype(matmul_dtype), ((0, Dp - D_in), (0, Dp - D_out)))
    bp = jnp.pad(b.astype(jnp.float32), (0, Dp - D_out)).reshape(1, Dp)

    # Decide whether a contraction (K) split is needed: the full-K x slab must
    # leave room for a reasonable tile_m and the (Dp, 128) weight slab must fit.
    fullk_max_tm = max(row_align,
                       (budg["x_budget"] // (2 * Dp * xbytes))
                       // row_align * row_align)
    need_ksplit = (
        tile_k is not None
        or fullk_max_tm < min(256, _round_up(M, row_align))
        or 2 * Dp * 128 * mmbytes > budg["w_budget"]
    )

    if not need_ksplit:
        # -------- Full-K path: x tile (TM, Dp) resident across feature axis ----
        if tile_n is None:
            # Largest divisor of Dp (multiple of 128) whose double-buffered
            # weight slab fits the budget; prefer multiples of 256 so the
            # 256x256 MXUs on v6e/v7x use all columns.
            best = None
            cand = Dp
            while cand >= 128:
                if Dp % cand == 0 and 2 * Dp * cand * mmbytes <= budg["w_budget"]:
                    if cand % 256 == 0:
                        best = cand
                        break
                    if best is None:
                        best = cand
                cand -= 128
            tile_n = best if best is not None else 128
        assert tile_n % 128 == 0 and Dp % tile_n == 0
        n_j = Dp // tile_n

        if tile_m is None:
            if n_j == 1 and M >= 4 * row_align:
                # Single feature tile: split M into >= 4 tiles so each v7x
                # TensorCore still gets >= 2 pipelined grid steps.
                tile_m = _round_up(_cdiv(M, 4), row_align)
            else:
                # Fewest M tiles: the weight matrix is re-streamed from HBM
                # once per M tile, so bigger tile_m = less weight traffic.
                tile_m = _round_up(M, row_align)
            tile_m = min(tile_m, budg["tm_cap"], fullk_max_tm)
        else:
            tile_m = max(row_align, _round_up(tile_m, row_align))

        Mp = _round_up(M, tile_m)
        n_i = Mp // tile_m
        xp = jnp.pad(x2, ((0, Mp - M), (0, Dp - D_in)))

        cost = pl.CostEstimate(
            flops=2 * M * D_in * D_out,
            transcendentals=0,
            bytes_accessed=int(Mp * Dp * xbytes            # x read once
                               + n_i * Dp * Dp * mmbytes   # W re-streamed / M tile
                               + n_i * Dp * 4              # bias
                               + Mp * Dp * xbytes),        # output write
        )

        kernel = functools.partial(_fullk_kernel, tile_n=tile_n, multi_n=n_j > 1)
        out = pl.pallas_call(
            kernel,
            out_shape=jax.ShapeDtypeStruct((Mp, Dp), x2.dtype),
            grid_spec=pltpu.PrefetchScalarGridSpec(
                num_scalar_prefetch=0,
                grid=(n_i, n_j),
                in_specs=[
                    pl.BlockSpec(memory_space=pltpu.MemorySpace.SMEM),    # alpha
                    pl.BlockSpec((tile_m, Dp), lambda i, j: (i, 0)),      # x (full K)
                    pl.BlockSpec((Dp, tile_n), lambda i, j: (0, j)),      # W^T slab
                    pl.BlockSpec((1, tile_n), lambda i, j: (0, j)),       # bias slab
                ],
                out_specs=pl.BlockSpec((tile_m, tile_n), lambda i, j: (i, j)),
            ),
            compiler_params=pltpu.CompilerParams(
                dimension_semantics=("parallel", "parallel"),
                vmem_limit_bytes=budg["vmem_limit"],
            ),
            cost_estimate=cost,
        )(alpha, xp, wt, bp)
        return out[:M, :D_out].reshape(orig_shape)

    # -------- K-split path: bounded slabs for large D ---------------------------
    if tile_n is None:
        tile_n = 256 if Dp % 256 == 0 else 128
    assert tile_n % 128 == 0 and Dp % tile_n == 0

    if tile_m is not None:
        tile_m = max(row_align, _round_up(tile_m, row_align))
        tgt_tm = tile_m
    else:
        tgt_tm = min(budg["tm_cap"], max(row_align, _round_up(M, row_align)))

    if tile_k is None:
        tile_k = 128
        cand = Dp
        while cand >= 128:
            if (Dp % cand == 0
                    and 2 * cand * tile_n * mmbytes <= budg["w_budget"]
                    and 2 * tgt_tm * cand * mmbytes <= budg["x_budget"]):
                tile_k = cand
                break
            cand -= 128
    assert tile_k % 128 == 0 and Dp % tile_k == 0

    if tile_m is None:
        max_tm_x = max(row_align,
                       (budg["x_budget"] // (2 * tile_k * mmbytes))
                       // row_align * row_align)
        tile_m = max(row_align, min(tgt_tm, max_tm_x))

    Mp = _round_up(M, tile_m)
    n_i, n_j, n_k = Mp // tile_m, Dp // tile_n, Dp // tile_k

    xp = jnp.pad(x2, ((0, Mp - M), (0, Dp - D_in)))
    # Matmul operand in matmul_dtype (halves its per-j re-streamed HBM bytes for
    # f32 inputs); the residual stays in the input dtype so resweight=0 is exact.
    xmm = xp if xp.dtype == jnp.dtype(matmul_dtype) else xp.astype(matmul_dtype)

    cost = pl.CostEstimate(
        flops=2 * M * D_in * D_out,
        transcendentals=0,
        bytes_accessed=int(n_j * Mp * Dp * mmbytes    # matmul x, re-streamed per j
                           + Mp * Dp * xbytes         # residual x, read once
                           + n_i * Dp * Dp * mmbytes  # W re-streamed per M tile
                           + n_i * Dp * 4             # bias
                           + Mp * Dp * xbytes),       # output write
    )

    out = pl.pallas_call(
        _ksplit_kernel,
        out_shape=jax.ShapeDtypeStruct((Mp, Dp), x2.dtype),
        grid_spec=pltpu.PrefetchScalarGridSpec(
            num_scalar_prefetch=0,
            grid=(n_i, n_j, n_k),
            in_specs=[
                pl.BlockSpec(memory_space=pltpu.MemorySpace.SMEM),        # alpha
                pl.BlockSpec((tile_m, tile_k), lambda i, j, k: (i, k)),   # x (matmul)
                pl.BlockSpec((tile_m, tile_n), lambda i, j, k: (i, j)),   # x (residual)
                pl.BlockSpec((tile_k, tile_n), lambda i, j, k: (k, j)),   # W^T block
                pl.BlockSpec((1, tile_n), lambda i, j, k: (0, j)),        # bias slab
            ],
            out_specs=pl.BlockSpec((tile_m, tile_n), lambda i, j, k: (i, j)),
            scratch_shapes=[pltpu.VMEM((tile_m, tile_n), jnp.float32)],
        ),
        compiler_params=pltpu.CompilerParams(
            dimension_semantics=("parallel", "parallel", "arbitrary"),
            vmem_limit_bytes=budg["vmem_limit"],
        ),
        cost_estimate=cost,
    )(alpha, xmm, xp, wt, bp)
    return out[:M, :D_out].reshape(orig_shape)


# ----------------------------------------------------------------------------
# Test
# ----------------------------------------------------------------------------
def reference(x, w, b, resweight):
    return x + resweight * jnp.maximum(x @ w.T + b, 0.0)


def _make_params(k_w, k_b, hidden):
    # Mirrors module __init__: xavier_normal_(gain=sqrt(2)) weight,
    # PyTorch Linear default uniform bias.
    gain = 2.0 ** 0.5
    std = gain * (2.0 / (hidden + hidden)) ** 0.5
    w = (std * jax.random.normal(k_w, (hidden, hidden))).astype(jnp.float32)
    bound = 1.0 / (hidden ** 0.5)
    b = jax.random.uniform(k_b, (hidden,), minval=-bound,
                           maxval=bound).astype(jnp.float32)
    return w, b


if __name__ == "__main__":
    key = jax.random.PRNGKey(0)
    k_x, k_w, k_b, k_x2, k_w2, k_b2 = jax.random.split(key, 6)

    batch, seq, hidden = 2, 8, 32          # inputs == outputs == hidden
    w, b = _make_params(k_w, k_b, hidden)
    x = jax.random.normal(k_x, (batch, seq, hidden), dtype=jnp.float32)
    rw = jnp.float32(0.37)
    ref1 = reference(x, w, b, rw)

    # 1) tiny-D dispatch goes through plain XLA (D <= 64 fallback).
    out_xla = jax.block_until_ready(rezero_linear(x, w, b, rw))
    assert out_xla.shape == x.shape
    assert jnp.allclose(out_xla, ref1, atol=1e-5, rtol=1e-5), "XLA fallback mismatch"

    # 2) forced Pallas path, resweight = 0 (module init): exact identity.
    out0 = jax.block_until_ready(
        rezero_linear(x, w, b, jnp.float32(0.0), force_pallas=True))
    assert out0.shape == x.shape
    assert jnp.allclose(out0, x, atol=1e-6, rtol=1e-6), "identity at resweight=0 broken"

    # 3) forced Pallas, default bf16-matmul path (relaxed tolerance vs f32 ref).
    out1 = jax.block_until_ready(rezero_linear(x, w, b, rw, force_pallas=True))
    assert jnp.allclose(out1, ref1, atol=3e-2, rtol=3e-2), "bf16 path mismatch"

    # 4) forced Pallas, f32-matmul path: tight tolerance.
    out2 = jax.block_until_ready(
        rezero_linear(x, w, b, rw, force_pallas=True, matmul_dtype=jnp.float32))
    assert jnp.allclose(out2, ref1, atol=1e-5, rtol=1e-5), "f32 path mismatch"

    # 5) larger hidden: multi-feature-tile path (residual sliced from the
    #    resident x tile) and the K-split accumulator path.
    hidden2 = 256
    w2, b2 = _make_params(k_w2, k_b2, hidden2)
    x2 = jax.random.normal(k_x2, (batch, seq, hidden2), dtype=jnp.float32)
    ref2 = reference(x2, w2, b2, rw)

    out3 = jax.block_until_ready(
        rezero_linear(x2, w2, b2, rw, tile_n=128, matmul_dtype=jnp.float32))
    assert jnp.allclose(out3, ref2, atol=1e-5, rtol=1e-5), "multi-N full-K mismatch"

    out4 = jax.block_until_ready(
        rezero_linear(x2, w2, b2, rw, tile_n=128, tile_k=128,
                      matmul_dtype=jnp.float32))
    assert jnp.allclose(out4, ref2, atol=1e-5, rtol=1e-5), "K-split f32 mismatch"

    out5 = jax.block_until_ready(rezero_linear(x2, w2, b2, rw, tile_k=128))
    assert jnp.allclose(out5, ref2, atol=3e-2, rtol=3e-2), "K-split bf16 mismatch"

    print("KERNEL_OK")
</pallas_src>

<mosaic_0001>
module attributes {stable_mosaic.version = 11 : i64} {
  func.func @_fullk_kernel(%arg0: i32, %arg1: i32, %arg2: memref<1xf32, #tpu.memory_space<smem>>, %arg3: memref<16x128xf32, #tpu.memory_space<vmem>>, %arg4: memref<128x128xbf16, #tpu.memory_space<vmem>>, %arg5: memref<1x128xf32, #tpu.memory_space<vmem>>, %arg6: memref<16x128xf32, #tpu.memory_space<vmem>>) attributes {dimension_semantics = [#tpu.dimension_semantics<parallel>, #tpu.dimension_semantics<parallel>], iteration_bounds = array<i64: 1, 1>, scalar_prefetch = 0 : i64, scratch_operands = 0 : i64, tpu.core_type = #tpu.core_type<tc>, window_params = [{transform_indices = @transform_0, window_bounds = array<i64: 1>}, {transform_indices = @transform_1, window_bounds = array<i64: 16, 128>}, {transform_indices = @transform_2, window_bounds = array<i64: 128, 128>}, {transform_indices = @transform_3, window_bounds = array<i64: 1, 128>}, {transform_indices = @transform_4, window_bounds = array<i64: 16, 128>}]} {
    %c0 = arith.constant 0 : index
    %c0_0 = arith.constant 0 : index
    %0 = vector.load %arg3[%c0, %c0_0] : memref<16x128xf32, #tpu.memory_space<vmem>>, vector<16x128xf32>
    %1 = arith.truncf %0 : vector<16x128xf32> to vector<16x128xbf16>
    %c0_1 = arith.constant 0 : index
    %c0_2 = arith.constant 0 : index
    %2 = vector.load %arg4[%c0_1, %c0_2] : memref<128x128xbf16, #tpu.memory_space<vmem>>, vector<128x128xbf16>
    %cst = arith.constant dense<0.000000e+00> : vector<16x128xf32>
    %3 = tpu.matmul %1, %2, %cst {dimension_numbers = #tpu.dot_dimension_numbers<[1], [0], [0], [1], [0, 0, 1, 1], [], []>} : vector<16x128xbf16>, vector<128x128xbf16>, vector<16x128xf32> -> vector<16x128xf32>
    %c0_3 = arith.constant 0 : index
    %c0_4 = arith.constant 0 : index
    %4 = vector.load %arg5[%c0_3, %c0_4] : memref<1x128xf32, #tpu.memory_space<vmem>>, vector<1x128xf32>
    %5 = vector.broadcast %4 : vector<1x128xf32> to vector<16x128xf32>
    %6 = arith.addf %3, %5 : vector<16x128xf32>
    %cst_5 = arith.constant 0.000000e+00 : f32
    %7 = vector.broadcast %cst_5 : f32 to vector<16x128xf32>
    %8 = arith.maximumf %6, %7 : vector<16x128xf32>
    %c0_6 = arith.constant 0 : index
    %9 = memref.load %arg2[%c0_6] : memref<1xf32, #tpu.memory_space<smem>>
    %10 = vector.broadcast %9 : f32 to vector<16x128xf32>
    %11 = arith.mulf %10, %8 : vector<16x128xf32>
    %12 = arith.addf %0, %11 : vector<16x128xf32>
    %c0_7 = arith.constant 0 : index
    %c0_8 = arith.constant 0 : index
    %13 = vector.load %arg6[%c0_7, %c0_8] : memref<16x128xf32, #tpu.memory_space<vmem>>, vector<16x128xf32>
    tpu.vector_store %arg6[%c0_7, %c0_8], %12 {strides = array<i32>} : memref<16x128xf32, #tpu.memory_space<vmem>>, vector<16x128xf32>,
    return
  }
  func.func @transform_0(%arg0: i32, %arg1: i32) -> i32 {
    %c0_i32 = arith.constant 0 : i32
    %c0_i32_0 = arith.constant 0 : i32
    return %c0_i32 : i32
  }
  func.func @transform_1(%arg0: i32, %arg1: i32) -> (i32, i32) {
    %c0_i32 = arith.constant 0 : i32
    %c0_i32_0 = arith.constant 0 : i32
    return %arg0, %c0_i32 : i32, i32
  }
  func.func @transform_2(%arg0: i32, %arg1: i32) -> (i32, i32) {
    %c0_i32 = arith.constant 0 : i32
    %c0_i32_0 = arith.constant 0 : i32
    return %c0_i32, %arg1 : i32, i32
  }
  func.func @transform_3(%arg0: i32, %arg1: i32) -> (i32, i32) {
    %c0_i32 = arith.constant 0 : i32
    %c0_i32_0 = arith.constant 0 : i32
    return %c0_i32, %arg1 : i32, i32
  }
  func.func @transform_4(%arg0: i32, %arg1: i32) -> (i32, i32) {
    %c0_i32 = arith.constant 0 : i32
    return %arg0, %arg1 : i32, i32
  }
}

</mosaic_0001>

<llo_original>
// kernel: tpu_custom_call.1
$region0: #{tpu_custom_call.1}
  #allocation0 [shape = 'u32[]', space=smem, size = 0x4, offset = 0x4, fixed_abs, tag = 'smem constant byte address 0x4 - core index']
  #allocation1 [shape = 'u32[144,128]{1,0:T(1,128)}', space=vmem, size = 0x12000, scoped, tag = 'internal scratch']
  #allocation2 [shape = 'f32[1]{0:T(128)S(6)}', space=smem, size = 0x200, scoped, tag = 'scoped memory for tpu_custom_call.1']
  %s0 = inlined_call_operand.<no memory space> [shape: f32[1], index: 0, kind: input, shape index: {}]
  %s1 = inlined_call_operand.hbm [shape: f32[16,128], index: 1, kind: input, shape index: {}]
  %s2 = inlined_call_operand.hbm [shape: bf16[128,128], index: 2, kind: input, shape index: {}]
  %s3 = inlined_call_operand.vmem [shape: f32[1,128], index: 3, kind: input, shape index: {}]
  %s4 = inlined_call_operand.hbm [shape: f32[16,128], index: 4, kind: output, shape index: {}]
  %s5 = sld [smem:[#allocation0]]
  $region34: #{tpu_custom_call.1} parent=0
    _
  %s7 = ssub.s32 1, %s5
  %s8 = scalar_select 0, %s7, %s5
  %9 = sst [smem:[#allocation2]] %s0
  $region1: #{tpu_custom_call.1} parent=0
    #allocation3 [shape = 'u8[8192]{0}', space=vmem, size = 0x2000, scoped, tag = 'input window, operand 1, single buffered']
    #allocation4 [shape = 's32[1]{0}', space=sflag, size = 0x4, scoped, tag = 'scoped memory for tpu_custom_call.1']
    #allocation5 [shape = 's32[1]{0}', space=sflag, size = 0x4, scoped, tag = 'scoped memory for tpu_custom_call.1']
    #allocation6 [shape = 'u8[32768]{0}', space=vmem, size = 0x8000, scoped, tag = 'input window, operand 2, single buffered']
    #allocation7 [shape = 's32[1]{0}', space=sflag, size = 0x4, scoped, tag = 'scoped memory for tpu_custom_call.1']
    #allocation8 [shape = 'u8[8192]{0}', space=vmem, size = 0x2000, scoped, tag = 'output window, operand 0, single buffered']
    %10 = vsyncpa [#allocation4], 0
    %11 = vsyncpa [#allocation7], 0
    %12 = vsyncpa [#allocation5], 0
    // Predicated region
    $region2: #{tpu_custom_call.1} parent=1 // pred_check
      _
    $region3: #{tpu_custom_call.1} parent=1 // pred_check_branch
      %14 = sbr.rel (0) target = $region5
    $region4: #{tpu_custom_call.1} parent=1 // pred_region
      _
    $region5: #{tpu_custom_call.1} parent=1 // pred_fallthru
      _
    // Predicated region
    $region6: #{tpu_custom_call.1} parent=1 // pred_check
      _
    $region7: #{tpu_custom_call.1} parent=1 // pred_check_branch
      %16 = sbr.rel (0) target = $region9
    $region8: #{tpu_custom_call.1} parent=1 // pred_region
      %s18 = ssub.s32 256, 256
      %19 = vsyncadd [#allocation4], %s18
      %s20 = sshll.u32 [#allocation3], 4
      %s21 = int_to_ptr.vmem [resolvable:$true] %s20
      %26 = dma.hbm_to_vmem [thread:$0]  %s1, 256, %s21, [#allocation4], 128, 128, 8
    $region9: #{tpu_custom_call.1} parent=1 // pred_fallthru
      _
    // Predicated region
    $region10: #{tpu_custom_call.1} parent=1 // pred_check
      _
    $region11: #{tpu_custom_call.1} parent=1 // pred_check_branch
      %28 = sbr.rel (0) target = $region13
    $region12: #{tpu_custom_call.1} parent=1 // pred_region
      %s30 = ssub.s32 1024, 1024
      %31 = vsyncadd [#allocation7], %s30
      %s32 = sshll.u32 [#allocation6], 4
      %s33 = int_to_ptr.vmem [resolvable:$true] %s32
      %38 = dma.hbm_to_vmem [thread:$0]  %s2, 1024, %s33, [#allocation7], 64, 64, 4
    $region13: #{tpu_custom_call.1} parent=1 // pred_fallthru
      _
    // Predicated region
    $region14: #{tpu_custom_call.1} parent=1 // pred_check
      _
    $region15: #{tpu_custom_call.1} parent=1 // pred_check_branch
      %40 = sbr.rel (0) target = $region17
    $region16: #{tpu_custom_call.1} parent=1 // pred_region
      _
    $region17: #{tpu_custom_call.1} parent=1 // pred_fallthru
      _
    // Predicated region
    $region18: #{tpu_custom_call.1} parent=1 // pred_check
      _
    $region19: #{tpu_custom_call.1} parent=1 // pred_check_branch
      %42 = sbr.rel (0) target = $region21
    $region20: #{tpu_custom_call.1} parent=1 // pred_region
      %43 = dma.done [#allocation4], 256
    $region21: #{tpu_custom_call.1} parent=1 // pred_fallthru
      _
    // Predicated region
    $region22: #{tpu_custom_call.1} parent=1 // pred_check
      _
    $region23: #{tpu_custom_call.1} parent=1 // pred_check_branch
      %45 = sbr.rel (0) target = $region25
    $region24: #{tpu_custom_call.1} parent=1 // pred_region
      %46 = dma.done [#allocation7], 1024
    $region25: #{tpu_custom_call.1} parent=1 // pred_fallthru
      _
    %v48 = vld [vmem:[#allocation3] sm:$0xff]
    %v49 = vld [vmem:[#allocation3 + $0x8] sm:$0xff]
    %v50 = vpack.c.bf16 %v49, %v48
    %v51 = vld [vmem:[#allocation6] sm:$0xf]
    %v52 = vld [vmem:[#allocation6 + $0x4] sm:$0xf]
    %v53 = vld [vmem:[#allocation6 + $0x8] sm:$0xf]
    %v54 = vld [vmem:[#allocation6 + $0xc] sm:$0xf]
    %v55 = vld [vmem:[#allocation6 + $0x10] sm:$0xf]
    %v56 = vld [vmem:[#allocation6 + $0x14] sm:$0xf]
    %v57 = vld [vmem:[#allocation6 + $0x18] sm:$0xf]
    %v58 = vld [vmem:[#allocation6 + $0x1c] sm:$0xf]
    %v59 = vld [vmem:[#allocation6 + $0x20] sm:$0xf]
    %v60 = vld [vmem:[#allocation6 + $0x24] sm:$0xf]
    %v61 = vld [vmem:[#allocation6 + $0x28] sm:$0xf]
    %v62 = vld [vmem:[#allocation6 + $0x2c] sm:$0xf]
    %v63 = vld [vmem:[#allocation6 + $0x30] sm:$0xf]
    %v64 = vld [vmem:[#allocation6 + $0x34] sm:$0xf]
    %v65 = vld [vmem:[#allocation6 + $0x38] sm:$0xf]
    %v66 = vld [vmem:[#allocation6 + $0x3c] sm:$0xf]
    %v67 = vld [vmem:[%s3] sm:$0x1]
    %v69 = vlaneseq
    %v70 = vshrl.u32 %v69, 7
    %v71 = vsub.s32 0, %v70
    %v72 = vrot.slane %v67, %v71
    %v90 = vunpack.c.l.b16 %v51
    %v91 = vunpack.c.l.b16 %v52
    %v92 = vunpack.c.l.b16 %v53
    %v93 = vunpack.c.l.b16 %v54
    %v94 = vunpack.c.l.b16 %v55
    %v95 = vunpack.c.l.b16 %v56
    %v96 = vunpack.c.l.b16 %v57
    %v97 = vunpack.c.l.b16 %v58
    %v98 = vunpack.c.l.b16 %v59
    %v99 = vunpack.c.l.b16 %v60
    %v100 = vunpack.c.l.b16 %v61
    %v101 = vunpack.c.l.b16 %v62
    %v102 = vunpack.c.l.b16 %v63
    %v103 = vunpack.c.l.b16 %v64
    %v104 = vunpack.c.l.b16 %v65
    %v105 = vunpack.c.l.b16 %v66
    %v106 = vpack.c.b16 %v91, %v90
    %v107 = vpack.c.b16 %v93, %v92
    %v108 = vpack.c.b16 %v95, %v94
    %v109 = vpack.c.b16 %v97, %v96
    %v110 = vpack.c.b16 %v99, %v98
    %v111 = vpack.c.b16 %v101, %v100
    %v112 = vpack.c.b16 %v103, %v102
    %v113 = vpack.c.b16 %v105, %v104
    %122 = vmatprep.subr.bf16.mxu0 0
    %123 = vmatpush1.bf16.msra.mxu0 %v106
    %124 = vmatprep.subr.bf16.mxu0 0
    %125 = vmatpush1.bf16.msra.mxu0 %v107
    %126 = vmatprep.subr.bf16.mxu0 0
    %127 = vmatpush1.bf16.msra.mxu0 %v108
    %128 = vmatprep.subr.bf16.mxu0 0
    %129 = vmatpush1.bf16.msra.mxu0 %v109
    %130 = vmatprep.subr.bf16.mxu0 0
    %131 = vmatpush1.bf16.msra.mxu0 %v110
    %132 = vmatprep.subr.bf16.mxu0 0
    %133 = vmatpush1.bf16.msra.mxu0 %v111
    %134 = vmatprep.subr.bf16.mxu0 0
    %135 = vmatpush1.bf16.msra.mxu0 %v112
    %136 = vmatprep.subr.bf16.mxu0 0
    %137 = vmatpush1.bf16.msra.mxu0 %v113
    %138 = vmatprep.subr.bf16.mxu0 0
    %139 = vmatpush1.bf16.msra.mxu0 0
    %140 = vmatprep.subr.bf16.mxu0 0
    %141 = vmatpush1.bf16.msra.mxu0 0
    %142 = vmatprep.subr.bf16.mxu0 0
    %143 = vmatpush1.bf16.msra.mxu0 0
    %144 = vmatprep.subr.bf16.mxu0 0
    %145 = vmatpush1.bf16.msra.mxu0 0
    %146 = vmatprep.subr.bf16.mxu0 0
    %147 = vmatpush1.bf16.msra.mxu0 0
    %148 = vmatprep.subr.bf16.mxu0 0
    %149 = vmatpush1.bf16.msra.mxu0 0
    %150 = vmatprep.subr.bf16.mxu0 0
    %151 = vmatpush1.bf16.msra.mxu0 0
    %152 = vmatprep.subr.bf16.mxu0 0
    %153 = vmatpush1.bf16.msra.mxu0 0
    %154 = vmatprep.mubr.bf16.mxu0 0
    %155 = vmatmul.mubr.bf16.gmra.mrb[0].mxu0 %v50
    %v156 = vpop.f32.mrb[0].mxu0
    %v157 = vadd.f32 %v72, %v156
    %v158 = vpop.f32.mrb[0].mxu0
    %v159 = vpop.f32.mrb[0].mxu0
    %v160 = vadd.f32 %v72, %v159
    %v161 = vpop.f32.mrb[0].mxu0
    %162 = vdwg.mxu0
    %v163 = vmax.f32 %v157, 0.0
    %v164 = vmax.f32 %v160, 0.0
    %s165 = sld [smem:[#allocation2]]
    %v166 = vstv %s165
    %v167 = vmul.f32 %v166, %v163
    %v168 = vmul.f32 %v166, %v164
    %v169 = vadd.f32 %v48, %v167
    %v170 = vadd.f32 %v49, %v168
    %171 = vst [vmem:[#allocation8] sm:$0xff] %v169
    %172 = vst [vmem:[#allocation8 + $0x8] sm:$0xff] %v170
    // Predicated region
    $region26: #{tpu_custom_call.1} parent=1 // pred_check
      _
    $region27: #{tpu_custom_call.1} parent=1 // pred_check_branch
      %174 = sbr.rel (0) target = $region29
    $region28: #{tpu_custom_call.1} parent=1 // pred_region
      %s176 = ssub.s32 256, 256
      %177 = vsyncadd [#allocation5], %s176
      %s178 = sshll.u32 [#allocation8], 4
      %s179 = int_to_ptr.vmem [resolvable:$true] %s178
      %184 = dma.vmem_to_hbm [thread:$0]  %s179, 256, %s4, [#allocation5], 128, 128, 8
    $region29: #{tpu_custom_call.1} parent=1 // pred_fallthru
      _
    // Predicated region
    $region30: #{tpu_custom_call.1} parent=1 // pred_check
      _
    $region31: #{tpu_custom_call.1} parent=1 // pred_check_branch
      %186 = sbr.rel (0) target = $region33
    $region32: #{tpu_custom_call.1} parent=1 // pred_region
      %187 = dma.done [#allocation5], 256
    $region33: #{tpu_custom_call.1} parent=1 // pred_fallthru
      _
    %188 = vsyncpa [#allocation4], 1
    %189 = vsyncpa [#allocation7], 1
    %190 = vsyncpa [#allocation5], 1

</llo_original>
